<compile_context>
chip_gen: v7x
topology: tpu7x:2x2x1
jax: 0.10.0
libtpu: 0.0.40
codegen_flags: <defaults>
</compile_context>

<pallas_src>
import functools
import math

import jax
import jax.numpy as jnp
from jax.experimental import pallas as pl
from jax.experimental.pallas import tpu as pltpu

_LANE = 128
_SUBLANE_BF16 = 16  # bf16 packs 16 rows per sublane-packed vreg


def _round_up(x, m):
    return ((x + m - 1) // m) * m


def _vmem_cap_bytes():
    """Conservative default for 64 MiB parts (v7x); raise on 128 MiB parts."""
    try:
        kind = jax.devices()[0].device_kind.lower()
    except Exception:
        kind = ""
    if "v5" in kind or "v6" in kind:
        return 96 * 2 ** 20
    return 56 * 2 ** 20


def _mlp_kernel(*refs, num_layers, alpha):
    """Fused MLP on one (TM, Kpad) bf16 row tile.

    refs = (x_ref, w0_ref, b0_ref, w1_ref, b1_ref, ..., o_ref)
    Weights: bf16 (in_pad, out_pad).  Biases: f32 (1, out_pad).  Output: bf16.
    """
    x_ref = refs[0]
    o_ref = refs[-1]
    params = refs[1:-1]
    assert len(params) == 2 * num_layers

    h = x_ref[...]                                   # bf16 (tm, kpad) straight to MXU
    for li in range(num_layers):
        w = params[2 * li][...]                      # bf16 (in_pad, out_pad)
        b = params[2 * li + 1][...]                  # f32  (1, out_pad)
        # MXU matmul in bf16, f32 accumulation; bias add in f32 on the VPU.
        h32 = jnp.dot(h, w, preferred_element_type=jnp.float32) + b
        if li < num_layers - 1:
            # LeakyReLU(0.2) in f32 (safe on v5e: no bf16 VALU there).
            h32 = jnp.where(h32 > 0, h32, alpha * h32)
            h = h32.astype(jnp.bfloat16)             # next layer's MXU operand
        else:
            h = h32
        # Dropout(0.5): identity in eval mode.
    o_ref[...] = h.astype(o_ref.dtype)               # lane-dense bf16 store


def _ctgan_forward(x2, flat_params, *, dims_pad, out_dim, alpha, apply_softmax,
                   vmem_cap):
    """Row-tiled Pallas forward.  x2: (m, packdim) f32; flat_params: padded (w, b)*L."""
    m, packdim = x2.shape
    kpad = dims_pad[0]
    opad = dims_pad[-1]
    num_layers = len(dims_pad) - 1

    # Rows padded only to the bf16 sublane multiple (single fused cast+pad, zeros).
    m_rows = _round_up(max(m, 1), _SUBLANE_BF16)

    # Row tile: multiple of 16, capped at 512, and sized so the parallel grid has
    # >= 2 steps whenever the batch is non-trivial (v7x: 2 TensorCores).
    n_tiles = max(2, pl.cdiv(m_rows, 512))
    tm = min(512, _round_up(pl.cdiv(m_rows, n_tiles), _SUBLANE_BF16))
    grid = (pl.cdiv(m_rows, tm),)

    # Exact-zero K padding (garbage here would propagate as NaN*0); zero row padding.
    x_bf = jnp.pad(x2.astype(jnp.bfloat16),
                   ((0, m_rows - m), (0, kpad - packdim)))

    in_specs = [pl.BlockSpec((tm, kpad), lambda i: (i, 0))]
    for p in flat_params:
        r, c = p.shape
        # Constant block index -> weights/biases stay VMEM-resident across the grid.
        in_specs.append(pl.BlockSpec((r, c), lambda i: (0, 0)))
    out_specs = pl.BlockSpec((tm, opad), lambda i: (i, 0))

    # Explicit VMEM budget: 2x-buffered bf16 x/out tiles + 2x params (Pallas
    # double-buffers even constant-index inputs) + f32/bf16 intermediates.
    param_bytes = sum(int(p.size) * p.dtype.itemsize for p in flat_params)
    widest = max(dims_pad)
    vmem_needed = (2 * tm * kpad * 2 + 2 * tm * opad * 2
                   + 2 * param_bytes + tm * widest * 12)
    vmem_limit = int(min(max(vmem_needed * 3 // 2, 16 * 2 ** 20), vmem_cap))

    flops = 2 * m_rows * sum(dims_pad[i] * dims_pad[i + 1] for i in range(num_layers))
    bytes_accessed = m_rows * kpad * 2 + param_bytes + m_rows * opad * 2
    cost = pl.CostEstimate(flops=flops, transcendentals=0,
                           bytes_accessed=bytes_accessed)

    kernel = functools.partial(_mlp_kernel, num_layers=num_layers, alpha=alpha)

    out_padded = pl.pallas_call(
        kernel,
        out_shape=jax.ShapeDtypeStruct((m_rows, opad), jnp.bfloat16),
        grid=grid,
        in_specs=in_specs,
        out_specs=out_specs,
        compiler_params=pltpu.CompilerParams(
            dimension_semantics=("parallel",),   # 2 TCs on v7x; harmless elsewhere
            vmem_limit_bytes=vmem_limit),
        cost_estimate=cost,
    )(x_bf, *flat_params)

    out = out_padded[:m, :out_dim].astype(jnp.float32)
    if apply_softmax:
        out = jax.nn.softmax(out, axis=1)
    return out


class CTGANDiscriminator:
    """JAX/Pallas re-implementation of the PyTorch CTGANDiscriminator forward."""

    def __init__(self, input_dim, discriminator_dim, output_dim=1, pack=10,
                 softmax=False, key=jax.random.PRNGKey(0)):
        self.pack = pack
        self.packdim = input_dim * pack
        self.output_dim = output_dim
        self.softmax = softmax

        dims = [self.packdim] + list(discriminator_dim) + [output_dim]
        self.dims = dims
        self.dims_pad = tuple(_round_up(d, _LANE) for d in dims)

        # torch.nn.Linear default init: U(-1/sqrt(fan_in), 1/sqrt(fan_in)); weights
        # stored (in, out) (transposed vs torch) so the hot path is a plain matmul.
        self.params = []
        for i in range(len(dims) - 1):
            fan_in, fan_out = dims[i], dims[i + 1]
            key, kw, kb = jax.random.split(key, 3)
            bound = 1.0 / math.sqrt(fan_in)
            w = jax.random.uniform(kw, (fan_in, fan_out), jnp.float32, -bound, bound)
            b = jax.random.uniform(kb, (1, fan_out), jnp.float32, -bound, bound)
            self.params.append((w, b))

        # Lane-padded (multiple-of-128) copies for the kernel: bf16 weights, f32 biases.
        flat = []
        for i, (w, b) in enumerate(self.params):
            ip, op = self.dims_pad[i], self.dims_pad[i + 1]
            wp = jnp.zeros((ip, op), jnp.bfloat16).at[:w.shape[0], :w.shape[1]].set(
                w.astype(jnp.bfloat16))
            bp = jnp.zeros((1, op), jnp.float32).at[:, :b.shape[1]].set(b)
            flat += [wp, bp]
        self.flat_params = tuple(flat)

        self._forward = jax.jit(functools.partial(
            _ctgan_forward,
            dims_pad=self.dims_pad,
            out_dim=output_dim,
            alpha=0.2,
            apply_softmax=softmax,
            vmem_cap=_vmem_cap_bytes()))

    def __call__(self, x):
        assert x.shape[0] % self.pack == 0
        x2 = x.reshape(-1, self.packdim).astype(jnp.float32)   # glue: view(-1, packdim)
        return self._forward(x2, self.flat_params)

    # Pure-JAX reference mirroring the kernel's bf16-matmul / f32-accumulate numerics.
    def reference(self, x):
        h = x.reshape(-1, self.packdim).astype(jnp.bfloat16)
        n = len(self.params)
        for li, (w, b) in enumerate(self.params):
            h32 = jnp.dot(h, w.astype(jnp.bfloat16),
                          preferred_element_type=jnp.float32) + b
            if li < n - 1:
                h32 = jnp.where(h32 > 0, h32, 0.2 * h32)
                h = h32.astype(jnp.bfloat16)
            else:
                h = h32
        out = h.astype(jnp.bfloat16).astype(jnp.float32)
        if self.softmax:
            out = jax.nn.softmax(out, axis=1)
        return out


if __name__ == "__main__":
    key = jax.random.PRNGKey(0)
    k_model, k_data = jax.random.split(key)

    input_dim = 8
    pack = 4
    batch = 8                     # must be divisible by pack -> 2 packed rows
    discriminator_dim = (32, 32)

    model = CTGANDiscriminator(input_dim, discriminator_dim, output_dim=1,
                               pack=pack, softmax=False, key=k_model)

    x = jax.random.normal(k_data, (batch, input_dim), jnp.float32)

    out = jax.block_until_ready(model(x))
    ref = model.reference(x)

    assert out.shape == (batch // pack, 1), out.shape
    assert jnp.allclose(out, ref, atol=1e-2, rtol=1e-2), (out, ref)

    print("KERNEL_OK")
</pallas_src>

<mosaic_0001>
module attributes {stable_mosaic.version = 11 : i64} {
  func.func @_mlp_kernel(%arg0: i32, %arg1: memref<16x128xbf16, #tpu.memory_space<vmem>>, %arg2: memref<128x128xbf16, #tpu.memory_space<vmem>>, %arg3: memref<1x128xf32, #tpu.memory_space<vmem>>, %arg4: memref<128x128xbf16, #tpu.memory_space<vmem>>, %arg5: memref<1x128xf32, #tpu.memory_space<vmem>>, %arg6: memref<128x128xbf16, #tpu.memory_space<vmem>>, %arg7: memref<1x128xf32, #tpu.memory_space<vmem>>, %arg8: memref<16x128xbf16, #tpu.memory_space<vmem>>) attributes {dimension_semantics = [#tpu.dimension_semantics<parallel>], iteration_bounds = array<i64: 1>, scalar_prefetch = 0 : i64, scratch_operands = 0 : i64, tpu.core_type = #tpu.core_type<tc>, window_params = [{transform_indices = @transform_0, window_bounds = array<i64: 16, 128>}, {pipeline_mode = #tpu.pipeline_mode<synchronous>, transform_indices = @transform_1, window_bounds = array<i64: 128, 128>}, {pipeline_mode = #tpu.pipeline_mode<synchronous>, transform_indices = @transform_2, window_bounds = array<i64: 1, 128>}, {pipeline_mode = #tpu.pipeline_mode<synchronous>, transform_indices = @transform_3, window_bounds = array<i64: 128, 128>}, {pipeline_mode = #tpu.pipeline_mode<synchronous>, transform_indices = @transform_4, window_bounds = array<i64: 1, 128>}, {pipeline_mode = #tpu.pipeline_mode<synchronous>, transform_indices = @transform_5, window_bounds = array<i64: 128, 128>}, {pipeline_mode = #tpu.pipeline_mode<synchronous>, transform_indices = @transform_6, window_bounds = array<i64: 1, 128>}, {transform_indices = @transform_7, window_bounds = array<i64: 16, 128>}]} {
    %c0 = arith.constant 0 : index
    %c0_0 = arith.constant 0 : index
    %0 = vector.load %arg1[%c0, %c0_0] : memref<16x128xbf16, #tpu.memory_space<vmem>>, vector<16x128xbf16>
    %c0_1 = arith.constant 0 : index
    %c0_2 = arith.constant 0 : index
    %1 = vector.load %arg2[%c0_1, %c0_2] : memref<128x128xbf16, #tpu.memory_space<vmem>>, vector<128x128xbf16>
    %c0_3 = arith.constant 0 : index
    %c0_4 = arith.constant 0 : index
    %2 = vector.load %arg3[%c0_3, %c0_4] : memref<1x128xf32, #tpu.memory_space<vmem>>, vector<1x128xf32>
    %cst = arith.constant dense<0.000000e+00> : vector<16x128xf32>
    %3 = tpu.matmul %0, %1, %cst {dimension_numbers = #tpu.dot_dimension_numbers<[1], [0], [0], [1], [0, 0, 1, 1], [], []>} : vector<16x128xbf16>, vector<128x128xbf16>, vector<16x128xf32> -> vector<16x128xf32>
    %4 = vector.broadcast %2 : vector<1x128xf32> to vector<16x128xf32>
    %5 = arith.addf %3, %4 : vector<16x128xf32>
    %cst_5 = arith.constant 0.000000e+00 : f32
    %6 = vector.broadcast %cst_5 : f32 to vector<16x128xf32>
    %7 = arith.cmpf ogt, %5, %6 : vector<16x128xf32>
    %cst_6 = arith.constant 2.000000e-01 : f32
    %8 = vector.broadcast %cst_6 : f32 to vector<16x128xf32>
    %9 = arith.mulf %8, %5 : vector<16x128xf32>
    %10 = arith.select %7, %5, %9 : vector<16x128xi1>, vector<16x128xf32>
    %11 = arith.truncf %10 : vector<16x128xf32> to vector<16x128xbf16>
    %c0_7 = arith.constant 0 : index
    %c0_8 = arith.constant 0 : index
    %12 = vector.load %arg4[%c0_7, %c0_8] : memref<128x128xbf16, #tpu.memory_space<vmem>>, vector<128x128xbf16>
    %c0_9 = arith.constant 0 : index
    %c0_10 = arith.constant 0 : index
    %13 = vector.load %arg5[%c0_9, %c0_10] : memref<1x128xf32, #tpu.memory_space<vmem>>, vector<1x128xf32>
    %cst_11 = arith.constant dense<0.000000e+00> : vector<16x128xf32>
    %14 = tpu.matmul %11, %12, %cst_11 {dimension_numbers = #tpu.dot_dimension_numbers<[1], [0], [0], [1], [0, 0, 1, 1], [], []>} : vector<16x128xbf16>, vector<128x128xbf16>, vector<16x128xf32> -> vector<16x128xf32>
    %15 = vector.broadcast %13 : vector<1x128xf32> to vector<16x128xf32>
    %16 = arith.addf %14, %15 : vector<16x128xf32>
    %cst_12 = arith.constant 0.000000e+00 : f32
    %17 = vector.broadcast %cst_12 : f32 to vector<16x128xf32>
    %18 = arith.cmpf ogt, %16, %17 : vector<16x128xf32>
    %cst_13 = arith.constant 2.000000e-01 : f32
    %19 = vector.broadcast %cst_13 : f32 to vector<16x128xf32>
    %20 = arith.mulf %19, %16 : vector<16x128xf32>
    %21 = arith.select %18, %16, %20 : vector<16x128xi1>, vector<16x128xf32>
    %22 = arith.truncf %21 : vector<16x128xf32> to vector<16x128xbf16>
    %c0_14 = arith.constant 0 : index
    %c0_15 = arith.constant 0 : index
    %23 = vector.load %arg6[%c0_14, %c0_15] : memref<128x128xbf16, #tpu.memory_space<vmem>>, vector<128x128xbf16>
    %c0_16 = arith.constant 0 : index
    %c0_17 = arith.constant 0 : index
    %24 = vector.load %arg7[%c0_16, %c0_17] : memref<1x128xf32, #tpu.memory_space<vmem>>, vector<1x128xf32>
    %cst_18 = arith.constant dense<0.000000e+00> : vector<16x128xf32>
    %25 = tpu.matmul %22, %23, %cst_18 {dimension_numbers = #tpu.dot_dimension_numbers<[1], [0], [0], [1], [0, 0, 1, 1], [], []>} : vector<16x128xbf16>, vector<128x128xbf16>, vector<16x128xf32> -> vector<16x128xf32>
    %26 = vector.broadcast %24 : vector<1x128xf32> to vector<16x128xf32>
    %27 = arith.addf %25, %26 : vector<16x128xf32>
    %28 = arith.truncf %27 : vector<16x128xf32> to vector<16x128xbf16>
    %c0_19 = arith.constant 0 : index
    %c0_20 = arith.constant 0 : index
    %29 = vector.load %arg8[%c0_19, %c0_20] : memref<16x128xbf16, #tpu.memory_space<vmem>>, vector<16x128xbf16>
    tpu.vector_store %arg8[%c0_19, %c0_20], %28 {strides = array<i32>} : memref<16x128xbf16, #tpu.memory_space<vmem>>, vector<16x128xbf16>,
    return
  }
  func.func @transform_0(%arg0: i32) -> (i32, i32) {
    %c0_i32 = arith.constant 0 : i32
    %c0_i32_0 = arith.constant 0 : i32
    return %arg0, %c0_i32 : i32, i32
  }
  func.func @transform_1(%arg0: i32) -> (i32, i32) {
    %c0_i32 = arith.constant 0 : i32
    %c0_i32_0 = arith.constant 0 : i32
    %c0_i32_1 = arith.constant 0 : i32
    return %c0_i32, %c0_i32_0 : i32, i32
  }
  func.func @transform_2(%arg0: i32) -> (i32, i32) {
    %c0_i32 = arith.constant 0 : i32
    %c0_i32_0 = arith.constant 0 : i32
    %c0_i32_1 = arith.constant 0 : i32
    return %c0_i32, %c0_i32_0 : i32, i32
  }
  func.func @transform_3(%arg0: i32) -> (i32, i32) {
    %c0_i32 = arith.constant 0 : i32
    %c0_i32_0 = arith.constant 0 : i32
    %c0_i32_1 = arith.constant 0 : i32
    return %c0_i32, %c0_i32_0 : i32, i32
  }
  func.func @transform_4(%arg0: i32) -> (i32, i32) {
    %c0_i32 = arith.constant 0 : i32
    %c0_i32_0 = arith.constant 0 : i32
    %c0_i32_1 = arith.constant 0 : i32
    return %c0_i32, %c0_i32_0 : i32, i32
  }
  func.func @transform_5(%arg0: i32) -> (i32, i32) {
    %c0_i32 = arith.constant 0 : i32
    %c0_i32_0 = arith.constant 0 : i32
    %c0_i32_1 = arith.constant 0 : i32
    return %c0_i32, %c0_i32_0 : i32, i32
  }
  func.func @transform_6(%arg0: i32) -> (i32, i32) {
    %c0_i32 = arith.constant 0 : i32
    %c0_i32_0 = arith.constant 0 : i32
    %c0_i32_1 = arith.constant 0 : i32
    return %c0_i32, %c0_i32_0 : i32, i32
  }
  func.func @transform_7(%arg0: i32) -> (i32, i32) {
    %c0_i32 = arith.constant 0 : i32
    %c0_i32_0 = arith.constant 0 : i32
    return %arg0, %c0_i32 : i32, i32
  }
}

</mosaic_0001>

<llo_original>
// kernel: _ctgan_forward.1
$region0: #{_ctgan_forward.1}
  #allocation0 [shape = 'u32[]', space=smem, size = 0x4, offset = 0x4, fixed_abs, tag = 'smem constant byte address 0x4 - core index']
  #allocation1 [shape = 'u32[144,128]{1,0:T(1,128)}', space=vmem, size = 0x12000, scoped, tag = 'internal scratch']
  %s0 = inlined_call_operand.vmem [shape: bf16[16,128], index: 0, kind: input, shape index: {}]
  %s1 = inlined_call_operand.hbm [shape: bf16[128,128], index: 1, kind: input, shape index: {}]
  %s2 = inlined_call_operand.vmem [shape: f32[1,128], index: 2, kind: input, shape index: {}]
  %s3 = inlined_call_operand.hbm [shape: bf16[128,128], index: 3, kind: input, shape index: {}]
  %s4 = inlined_call_operand.vmem [shape: f32[1,128], index: 4, kind: input, shape index: {}]
  %s5 = inlined_call_operand.hbm [shape: bf16[128,128], index: 5, kind: input, shape index: {}]
  %s6 = inlined_call_operand.vmem [shape: f32[1,128], index: 6, kind: input, shape index: {}]
  %s7 = inlined_call_operand.vmem [shape: bf16[16,128], index: 7, kind: output, shape index: {}]
  %s8 = sld [smem:[#allocation0]]
  $region50: #{_ctgan_forward.1} parent=0
    _
  %s10 = ssub.s32 1, %s8
  %s11 = scalar_select 0, %s10, %s8
  $region1: #{_ctgan_forward.1} parent=0
    #allocation2 [shape = 'u8[32768]{0}', space=vmem, size = 0x8000, scoped, tag = 'input window, operand 1, single buffered']
    #allocation3 [shape = 's32[1]{0}', space=sflag, size = 0x4, scoped, tag = 'scoped memory for _ctgan_forward.1']
    #allocation4 [shape = 'u8[32768]{0}', space=vmem, size = 0x8000, scoped, tag = 'input window, operand 3, single buffered']
    #allocation5 [shape = 's32[1]{0}', space=sflag, size = 0x4, scoped, tag = 'scoped memory for _ctgan_forward.1']
    #allocation6 [shape = 'u8[32768]{0}', space=vmem, size = 0x8000, scoped, tag = 'input window, operand 5, single buffered']
    %12 = vsyncpa [#allocation3], 0
    %13 = vsyncpa [#allocation5], 0
    // Predicated region
    $region2: #{_ctgan_forward.1} parent=1 // pred_check
      _
    $region3: #{_ctgan_forward.1} parent=1 // pred_check_branch
      %15 = sbr.rel (0) target = $region5
    $region4: #{_ctgan_forward.1} parent=1 // pred_region
      _
    $region5: #{_ctgan_forward.1} parent=1 // pred_fallthru
      _
    // Predicated region
    $region6: #{_ctgan_forward.1} parent=1 // pred_check
      _
    $region7: #{_ctgan_forward.1} parent=1 // pred_check_branch
      %17 = sbr.rel (0) target = $region9
    $region8: #{_ctgan_forward.1} parent=1 // pred_region
      %s19 = ssub.s32 1024, 1024
      %20 = vsyncadd [#allocation3], %s19
      %s21 = sshll.u32 [#allocation2], 4
      %s22 = int_to_ptr.vmem [resolvable:$true] %s21
      %27 = dma.hbm_to_vmem [thread:$0]  %s1, 1024, %s22, [#allocation3], 64, 64, 4
    $region9: #{_ctgan_forward.1} parent=1 // pred_fallthru
      _
    // Predicated region
    $region10: #{_ctgan_forward.1} parent=1 // pred_check
      _
    $region11: #{_ctgan_forward.1} parent=1 // pred_check_branch
      %29 = sbr.rel (0) target = $region13
    $region12: #{_ctgan_forward.1} parent=1 // pred_region
      _
    $region13: #{_ctgan_forward.1} parent=1 // pred_fallthru
      _
    // Predicated region
    $region14: #{_ctgan_forward.1} parent=1 // pred_check
      _
    $region15: #{_ctgan_forward.1} parent=1 // pred_check_branch
      %31 = sbr.rel (0) target = $region17
    $region16: #{_ctgan_forward.1} parent=1 // pred_region
      %s33 = ssub.s32 1024, 1024
      %34 = vsyncadd [#allocation5], %s33
      %s35 = sshll.u32 [#allocation4], 4
      %s36 = int_to_ptr.vmem [resolvable:$true] %s35
      %41 = dma.hbm_to_vmem [thread:$0]  %s3, 1024, %s36, [#allocation5], 64, 64, 4
    $region17: #{_ctgan_forward.1} parent=1 // pred_fallthru
      _
    // Predicated region
    $region18: #{_ctgan_forward.1} parent=1 // pred_check
      _
    $region19: #{_ctgan_forward.1} parent=1 // pred_check_branch
      %43 = sbr.rel (0) target = $region21
    $region20: #{_ctgan_forward.1} parent=1 // pred_region
      _
    $region21: #{_ctgan_forward.1} parent=1 // pred_fallthru
      _
    // Predicated region
    $region22: #{_ctgan_forward.1} parent=1 // pred_check
      _
    $region23: #{_ctgan_forward.1} parent=1 // pred_check_branch
      %45 = sbr.rel (0) target = $region25
    $region24: #{_ctgan_forward.1} parent=1 // pred_region
      %s47 = ssub.s32 1024, 1024
      %48 = vsyncadd [#allocation5], %s47
      %s49 = sshll.u32 [#allocation6], 4
      %s50 = int_to_ptr.vmem [resolvable:$true] %s49
      %55 = dma.hbm_to_vmem [thread:$0]  %s5, 1024, %s50, [#allocation5], 64, 64, 4
    $region25: #{_ctgan_forward.1} parent=1 // pred_fallthru
      _
    // Predicated region
    $region26: #{_ctgan_forward.1} parent=1 // pred_check
      _
    $region27: #{_ctgan_forward.1} parent=1 // pred_check_branch
      %57 = sbr.rel (0) target = $region29
    $region28: #{_ctgan_forward.1} parent=1 // pred_region
      _
    $region29: #{_ctgan_forward.1} parent=1 // pred_fallthru
      _
    // Predicated region
    $region30: #{_ctgan_forward.1} parent=1 // pred_check
      _
    $region31: #{_ctgan_forward.1} parent=1 // pred_check_branch
      %59 = sbr.rel (0) target = $region33
    $region32: #{_ctgan_forward.1} parent=1 // pred_region
      %60 = dma.done [#allocation3], 1024
    $region33: #{_ctgan_forward.1} parent=1 // pred_fallthru
      _
    // Predicated region
    $region34: #{_ctgan_forward.1} parent=1 // pred_check
      _
    $region35: #{_ctgan_forward.1} parent=1 // pred_check_branch
      %62 = sbr.rel (0) target = $region37
    $region36: #{_ctgan_forward.1} parent=1 // pred_region
      %63 = dma.done [#allocation5], 1024
    $region37: #{_ctgan_forward.1} parent=1 // pred_fallthru
      _
    // Predicated region
    $region38: #{_ctgan_forward.1} parent=1 // pred_check
      _
    $region39: #{_ctgan_forward.1} parent=1 // pred_check_branch
      %65 = sbr.rel (0) target = $region41
    $region40: #{_ctgan_forward.1} parent=1 // pred_region
      %66 = dma.done [#allocation5], 1024
    $region41: #{_ctgan_forward.1} parent=1 // pred_fallthru
      _
    %v68 = vld [vmem:[%s0] sm:$0xf]
    %v69 = vld [vmem:[%s0 + $0x4] sm:$0xf]
    %v70 = vld [vmem:[#allocation2] sm:$0xf]
    %v71 = vld [vmem:[#allocation2 + $0x4] sm:$0xf]
    %v72 = vld [vmem:[#allocation2 + $0x8] sm:$0xf]
    %v73 = vld [vmem:[#allocation2 + $0xc] sm:$0xf]
    %v74 = vld [vmem:[#allocation2 + $0x10] sm:$0xf]
    %v75 = vld [vmem:[#allocation2 + $0x14] sm:$0xf]
    %v76 = vld [vmem:[#allocation2 + $0x18] sm:$0xf]
    %v77 = vld [vmem:[#allocation2 + $0x1c] sm:$0xf]
    %v78 = vld [vmem:[#allocation2 + $0x20] sm:$0xf]
    %v79 = vld [vmem:[#allocation2 + $0x24] sm:$0xf]
    %v80 = vld [vmem:[#allocation2 + $0x28] sm:$0xf]
    %v81 = vld [vmem:[#allocation2 + $0x2c] sm:$0xf]
    %v82 = vld [vmem:[#allocation2 + $0x30] sm:$0xf]
    %v83 = vld [vmem:[#allocation2 + $0x34] sm:$0xf]
    %v84 = vld [vmem:[#allocation2 + $0x38] sm:$0xf]
    %v85 = vld [vmem:[#allocation2 + $0x3c] sm:$0xf]
    %v86 = vld [vmem:[%s2] sm:$0x1]
    %v88 = vlaneseq
    %v89 = vshrl.u32 %v88, 7
    %v90 = vsub.s32 0, %v89
    %v91 = vrot.slane %v86, %v90
    %v95 = vunpack.c.l.b16 %v68
    %v96 = vunpack.c.l.b16 %v69
    %v97 = vpack.c.b16 %v96, %v95
    %v115 = vunpack.c.l.b16 %v70
    %v116 = vunpack.c.l.b16 %v71
    %v117 = vunpack.c.l.b16 %v72
    %v118 = vunpack.c.l.b16 %v73
    %v119 = vunpack.c.l.b16 %v74
    %v120 = vunpack.c.l.b16 %v75
    %v121 = vunpack.c.l.b16 %v76
    %v122 = vunpack.c.l.b16 %v77
    %v123 = vunpack.c.l.b16 %v78
    %v124 = vunpack.c.l.b16 %v79
    %v125 = vunpack.c.l.b16 %v80
    %v126 = vunpack.c.l.b16 %v81
    %v127 = vunpack.c.l.b16 %v82
    %v128 = vunpack.c.l.b16 %v83
    %v129 = vunpack.c.l.b16 %v84
    %v130 = vunpack.c.l.b16 %v85
    %v131 = vpack.c.b16 %v116, %v115
    %v132 = vpack.c.b16 %v118, %v117
    %v133 = vpack.c.b16 %v120, %v119
    %v134 = vpack.c.b16 %v122, %v121
    %v135 = vpack.c.b16 %v124, %v123
    %v136 = vpack.c.b16 %v126, %v125
    %v137 = vpack.c.b16 %v128, %v127
    %v138 = vpack.c.b16 %v130, %v129
    %147 = vmatprep.subr.bf16.mxu0 0
    %148 = vmatpush1.bf16.msra.mxu0 %v131
    %149 = vmatprep.subr.bf16.mxu0 0
    %150 = vmatpush1.bf16.msra.mxu0 %v132
    %151 = vmatprep.subr.bf16.mxu0 0
    %152 = vmatpush1.bf16.msra.mxu0 %v133
    %153 = vmatprep.subr.bf16.mxu0 0
    %154 = vmatpush1.bf16.msra.mxu0 %v134
    %155 = vmatprep.subr.bf16.mxu0 0
    %156 = vmatpush1.bf16.msra.mxu0 %v135
    %157 = vmatprep.subr.bf16.mxu0 0
    %158 = vmatpush1.bf16.msra.mxu0 %v136
    %159 = vmatprep.subr.bf16.mxu0 0
    %160 = vmatpush1.bf16.msra.mxu0 %v137
    %161 = vmatprep.subr.bf16.mxu0 0
    %162 = vmatpush1.bf16.msra.mxu0 %v138
    %163 = vmatprep.subr.bf16.mxu0 0
    %164 = vmatpush1.bf16.msra.mxu0 0
    %165 = vmatprep.subr.bf16.mxu0 0
    %166 = vmatpush1.bf16.msra.mxu0 0
    %167 = vmatprep.subr.bf16.mxu0 0
    %168 = vmatpush1.bf16.msra.mxu0 0
    %169 = vmatprep.subr.bf16.mxu0 0
    %170 = vmatpush1.bf16.msra.mxu0 0
    %171 = vmatprep.subr.bf16.mxu0 0
    %172 = vmatpush1.bf16.msra.mxu0 0
    %173 = vmatprep.subr.bf16.mxu0 0
    %174 = vmatpush1.bf16.msra.mxu0 0
    %175 = vmatprep.subr.bf16.mxu0 0
    %176 = vmatpush1.bf16.msra.mxu0 0
    %177 = vmatprep.subr.bf16.mxu0 0
    %178 = vmatpush1.bf16.msra.mxu0 0
    %179 = vmatprep.mubr.bf16.mxu0 0
    %180 = vmatmul.mubr.bf16.gmra.mrb[0].mxu0 %v97
    %v181 = vpop.f32.mrb[0].mxu0
    %v182 = vadd.f32 %v91, %v181
    %v183 = vpop.f32.mrb[0].mxu0
    %v184 = vpop.f32.mrb[0].mxu0
    %v185 = vadd.f32 %v91, %v184
    %v186 = vpop.f32.mrb[0].mxu0
    %187 = vdwg.mxu0
    %vm188 = vcmp.gt.f32.partialorder %v182, 0.0
    %vm189 = vcmp.gt.f32.partialorder %v185, 0.0
    %v190 = vmul.f32 %v182, 0.2
    %v191 = vmul.f32 %v185, 0.2
    %v192 = vsel %vm188, %v182, %v190
    %v193 = vsel %vm189, %v185, %v191
    %v194 = vpack.c.bf16 %v193, %v192
    %v195 = vld [vmem:[#allocation4] sm:$0xf]
    %v196 = vld [vmem:[#allocation4 + $0x4] sm:$0xf]
    %v197 = vld [vmem:[#allocation4 + $0x8] sm:$0xf]
    %v198 = vld [vmem:[#allocation4 + $0xc] sm:$0xf]
    %v199 = vld [vmem:[#allocation4 + $0x10] sm:$0xf]
    %v200 = vld [vmem:[#allocation4 + $0x14] sm:$0xf]
    %v201 = vld [vmem:[#allocation4 + $0x18] sm:$0xf]
    %v202 = vld [vmem:[#allocation4 + $0x1c] sm:$0xf]
    %v203 = vld [vmem:[#allocation4 + $0x20] sm:$0xf]
    %v204 = vld [vmem:[#allocation4 + $0x24] sm:$0xf]
    %v205 = vld [vmem:[#allocation4 + $0x28] sm:$0xf]
    %v206 = vld [vmem:[#allocation4 + $0x2c] sm:$0xf]
    %v207 = vld [vmem:[#allocation4 + $0x30] sm:$0xf]
    %v208 = vld [vmem:[#allocation4 + $0x34] sm:$0xf]
    %v209 = vld [vmem:[#allocation4 + $0x38] sm:$0xf]
    %v210 = vld [vmem:[#allocation4 + $0x3c] sm:$0xf]
    %v211 = vld [vmem:[%s4] sm:$0x1]
    %v213 = vlaneseq
    %v214 = vshrl.u32 %v213, 7
    %v215 = vsub.s32 0, %v214
    %v216 = vrot.slane %v211, %v215
    %v234 = vunpack.c.l.b16 %v195
    %v235 = vunpack.c.l.b16 %v196
    %v236 = vunpack.c.l.b16 %v197
    %v237 = vunpack.c.l.b16 %v198
    %v238 = vunpack.c.l.b16 %v199
    %v239 = vunpack.c.l.b16 %v200
    %v240 = vunpack.c.l.b16 %v201
    %v241 = vunpack.c.l.b16 %v202
    %v242 = vunpack.c.l.b16 %v203
    %v243 = vunpack.c.l.b16 %v204
    %v244 = vunpack.c.l.b16 %v205
    %v245 = vunpack.c.l.b16 %v206
    %v246 = vunpack.c.l.b16 %v207
    %v247 = vunpack.c.l.b16 %v208
    %v248 = vunpack.c.l.b16 %v209
    %v249 = vunpack.c.l.b16 %v210
    %v250 = vpack.c.b16 %v235, %v234
    %v251 = vpack.c.b16 %v237, %v236
    %v252 = vpack.c.b16 %v239, %v238
    %v253 = vpack.c.b16 %v241, %v240
    %v254 = vpack.c.b16 %v243, %v242
    %v255 = vpack.c.b16 %v245, %v244
    %v256 = vpack.c.b16 %v247, %v246
    %v257 = vpack.c.b16 %v249, %v248
    %266 = vmatprep.subr.bf16.mxu0 0
    %267 = vmatpush1.bf16.msra.mxu0 %v250
    %268 = vmatprep.subr.bf16.mxu0 0
    %269 = vmatpush1.bf16.msra.mxu0 %v251
    %270 = vmatprep.subr.bf16.mxu0 0
    %271 = vmatpush1.bf16.msra.mxu0 %v252
    %272 = vmatprep.subr.bf16.mxu0 0
    %273 = vmatpush1.bf16.msra.mxu0 %v253
    %274 = vmatprep.subr.bf16.mxu0 0
    %275 = vmatpush1.bf16.msra.mxu0 %v254
    %276 = vmatprep.subr.bf16.mxu0 0
    %277 = vmatpush1.bf16.msra.mxu0 %v255
    %278 = vmatprep.subr.bf16.mxu0 0
    %279 = vmatpush1.bf16.msra.mxu0 %v256
    %280 = vmatprep.subr.bf16.mxu0 0
    %281 = vmatpush1.bf16.msra.mxu0 %v257
    %282 = vmatprep.subr.bf16.mxu0 0
    %283 = vmatpush1.bf16.msra.mxu0 0
    %284 = vmatprep.subr.bf16.mxu0 0
    %285 = vmatpush1.bf16.msra.mxu0 0
    %286 = vmatprep.subr.bf16.mxu0 0
    %287 = vmatpush1.bf16.msra.mxu0 0
    %288 = vmatprep.subr.bf16.mxu0 0
    %289 = vmatpush1.bf16.msra.mxu0 0
    %290 = vmatprep.subr.bf16.mxu0 0
    %291 = vmatpush1.bf16.msra.mxu0 0
    %292 = vmatprep.subr.bf16.mxu0 0
    %293 = vmatpush1.bf16.msra.mxu0 0
    %294 = vmatprep.subr.bf16.mxu0 0
    %295 = vmatpush1.bf16.msra.mxu0 0
    %296 = vmatprep.subr.bf16.mxu0 0
    %297 = vmatpush1.bf16.msra.mxu0 0
    %298 = vmatprep.mubr.bf16.mxu0 0
    %299 = vmatmul.mubr.bf16.gmra.mrb[0].mxu0 %v194
    %v300 = vpop.f32.mrb[0].mxu0
    %v301 = vadd.f32 %v216, %v300
    %v302 = vpop.f32.mrb[0].mxu0
    %v303 = vpop.f32.mrb[0].mxu0
    %v304 = vadd.f32 %v216, %v303
    %v305 = vpop.f32.mrb[0].mxu0
    %306 = vdwg.mxu0
    %vm307 = vcmp.gt.f32.partialorder %v301, 0.0
    %vm308 = vcmp.gt.f32.partialorder %v304, 0.0
    %v309 = vmul.f32 %v301, 0.2
    %v310 = vmul.f32 %v304, 0.2
    %v311 = vsel %vm307, %v301, %v309
    %v312 = vsel %vm308, %v304, %v310
    %v313 = vpack.c.bf16 %v312, %v311
    %v314 = vld [vmem:[#allocation6] sm:$0xf]
    %v315 = vld [vmem:[#allocation6 + $0x4] sm:$0xf]
    %v316 = vld [vmem:[#allocation6 + $0x8] sm:$0xf]
    %v317 = vld [vmem:[#allocation6 + $0xc] sm:$0xf]
    %v318 = vld [vmem:[#allocation6 + $0x10] sm:$0xf]
    %v319 = vld [vmem:[#allocation6 + $0x14] sm:$0xf]
    %v320 = vld [vmem:[#allocation6 + $0x18] sm:$0xf]
    %v321 = vld [vmem:[#allocation6 + $0x1c] sm:$0xf]
    %v322 = vld [vmem:[#allocation6 + $0x20] sm:$0xf]
    %v323 = vld [vmem:[#allocation6 + $0x24] sm:$0xf]
    %v324 = vld [vmem:[#allocation6 + $0x28] sm:$0xf]
    %v325 = vld [vmem:[#allocation6 + $0x2c] sm:$0xf]
    %v326 = vld [vmem:[#allocation6 + $0x30] sm:$0xf]
    %v327 = vld [vmem:[#allocation6 + $0x34] sm:$0xf]
    %v328 = vld [vmem:[#allocation6 + $0x38] sm:$0xf]
    %v329 = vld [vmem:[#allocation6 + $0x3c] sm:$0xf]
    %v330 = vld [vmem:[%s6] sm:$0x1]
    %v332 = vlaneseq
    %v333 = vshrl.u32 %v332, 7
    %v334 = vsub.s32 0, %v333
    %v335 = vrot.slane %v330, %v334
    %v353 = vunpack.c.l.b16 %v314
    %v354 = vunpack.c.l.b16 %v315
    %v355 = vunpack.c.l.b16 %v316
    %v356 = vunpack.c.l.b16 %v317
    %v357 = vunpack.c.l.b16 %v318
    %v358 = vunpack.c.l.b16 %v319
    %v359 = vunpack.c.l.b16 %v320
    %v360 = vunpack.c.l.b16 %v321
    %v361 = vunpack.c.l.b16 %v322
    %v362 = vunpack.c.l.b16 %v323
    %v363 = vunpack.c.l.b16 %v324
    %v364 = vunpack.c.l.b16 %v325
    %v365 = vunpack.c.l.b16 %v326
    %v366 = vunpack.c.l.b16 %v327
    %v367 = vunpack.c.l.b16 %v328
    %v368 = vunpack.c.l.b16 %v329
    %v369 = vpack.c.b16 %v354, %v353
    %v370 = vpack.c.b16 %v356, %v355
    %v371 = vpack.c.b16 %v358, %v357
    %v372 = vpack.c.b16 %v360, %v359
    %v373 = vpack.c.b16 %v362, %v361
    %v374 = vpack.c.b16 %v364, %v363
    %v375 = vpack.c.b16 %v366, %v365
    %v376 = vpack.c.b16 %v368, %v367
    %385 = vmatprep.subr.bf16.mxu0 0
    %386 = vmatpush1.bf16.msra.mxu0 %v369
    %387 = vmatprep.subr.bf16.mxu0 0
    %388 = vmatpush1.bf16.msra.mxu0 %v370
    %389 = vmatprep.subr.bf16.mxu0 0
    %390 = vmatpush1.bf16.msra.mxu0 %v371
    %391 = vmatprep.subr.bf16.mxu0 0
    %392 = vmatpush1.bf16.msra.mxu0 %v372
    %393 = vmatprep.subr.bf16.mxu0 0
    %394 = vmatpush1.bf16.msra.mxu0 %v373
    %395 = vmatprep.subr.bf16.mxu0 0
    %396 = vmatpush1.bf16.msra.mxu0 %v374
    %397 = vmatprep.subr.bf16.mxu0 0
    %398 = vmatpush1.bf16.msra.mxu0 %v375
    %399 = vmatprep.subr.bf16.mxu0 0
    %400 = vmatpush1.bf16.msra.mxu0 %v376
    %401 = vmatprep.subr.bf16.mxu0 0
    %402 = vmatpush1.bf16.msra.mxu0 0
    %403 = vmatprep.subr.bf16.mxu0 0
    %404 = vmatpush1.bf16.msra.mxu0 0
    %405 = vmatprep.subr.bf16.mxu0 0
    %406 = vmatpush1.bf16.msra.mxu0 0
    %407 = vmatprep.subr.bf16.mxu0 0
    %408 = vmatpush1.bf16.msra.mxu0 0
    %409 = vmatprep.subr.bf16.mxu0 0
    %410 = vmatpush1.bf16.msra.mxu0 0
    %411 = vmatprep.subr.bf16.mxu0 0
    %412 = vmatpush1.bf16.msra.mxu0 0
    %413 = vmatprep.subr.bf16.mxu0 0
    %414 = vmatpush1.bf16.msra.mxu0 0
    %415 = vmatprep.subr.bf16.mxu0 0
    %416 = vmatpush1.bf16.msra.mxu0 0
    %417 = vmatprep.mubr.bf16.mxu0 0
    %418 = vmatmul.mubr.bf16.gmra.mrb[0].mxu0 %v313
    %v419 = vpop.f32.mrb[0].mxu0
    %v420 = vadd.f32 %v335, %v419
    %v421 = vpop.f32.mrb[0].mxu0
    %v422 = vpop.f32.mrb[0].mxu0
    %v423 = vadd.f32 %v335, %v422
    %v424 = vpop.f32.mrb[0].mxu0
    %425 = vdwg.mxu0
    %v426 = vpack.c.bf16 %v423, %v420
    %v428 = vunpack.c.l.b16 %v426
    %v429 = vunpack.c.h.b16 %v426
    %v430 = vpack.c.b16 %v428, %v428
    %v431 = vpack.c.b16 %v429, %v429
    %434 = vst [vmem:[%s7] sm:$0xf] %v430
    %435 = vst [vmem:[%s7 + $0x4] sm:$0xf] %v431
    // Predicated region
    $region42: #{_ctgan_forward.1} parent=1 // pred_check
      _
    $region43: #{_ctgan_forward.1} parent=1 // pred_check_branch
      %437 = sbr.rel (0) target = $region45
    $region44: #{_ctgan_forward.1} parent=1 // pred_region
      _
    $region45: #{_ctgan_forward.1} parent=1 // pred_fallthru
      _
    // Predicated region
    $region46: #{_ctgan_forward.1} parent=1 // pred_check
      _
    $region47: #{_ctgan_forward.1} parent=1 // pred_check_branch
      %439 = sbr.rel (0) target = $region49
    $region48: #{_ctgan_forward.1} parent=1 // pred_region
      _
    $region49: #{_ctgan_forward.1} parent=1 // pred_fallthru
      _
    %440 = vsyncpa [#allocation3], 1
    %441 = vsyncpa [#allocation5], 1

</llo_original>
